<compile_context>
chip_gen: v7x
topology: tpu7x:2x2x1
jax: 0.10.0
libtpu: 0.0.40
codegen_flags: <defaults>
</compile_context>

<pallas_src>
import functools

import jax
import jax.numpy as jnp
from jax.experimental import pallas as pl
from jax.experimental.pallas import tpu as pltpu

_HI = jax.lax.Precision.HIGHEST


def _round_up(n, m):
    return ((n + m - 1) // m) * m


def _vmem_budget_bytes():
    # ~80% of physical per-TensorCore VMEM, leaving headroom for Mosaic
    # internal scratch/semaphores (v7x: ~51 MiB of 64; v5e/v6e: ~102 of 128).
    try:
        cap = int(pltpu.get_tpu_info().vmem_capacity_bytes)
    except Exception:
        cap = 64 * 1024 * 1024  # conservative (v7x-class) fallback
    return (cap * 4) // 5


# ----------------------------- Path A kernel --------------------------------
def _fm_resident_kernel(x_ref, v_ref, o_ref):
    # x tile: [TB, D] streamed; v: [D, L_pad] resident; o tile: [TB, L].
    # v*v is recomputed per step on the VPU (negligible vs. MXU work) to avoid
    # a second resident weight operand / HBM stream. Epilogue stays f32: the
    # FM identity is a cancellation of two similar-magnitude terms.
    x = x_ref[...]
    v = v_ref[...]
    xv = jnp.dot(x, v, preferred_element_type=jnp.float32, precision=_HI)
    x2v2 = jnp.dot(x * x, v * v, preferred_element_type=jnp.float32, precision=_HI)
    res = 0.5 * (xv * xv - x2v2)
    # Store only the valid latent columns (narrow HBM output, no wrapper slice).
    o_ref[...] = res[:, : o_ref.shape[1]].astype(o_ref.dtype)


# ----------------------------- Path B kernel --------------------------------
def _fm_ksplit_kernel(x_ref, v_ref, o_ref, xv_acc, x2v2_acc, *, d_total, tk, mask_tail):
    # grid = (batch tiles [parallel], K tiles [arbitrary]).
    k = pl.program_id(1)
    nk = pl.num_programs(1)

    @pl.when(k == 0)
    def _():
        xv_acc[...] = jnp.zeros_like(xv_acc)
        x2v2_acc[...] = jnp.zeros_like(x2v2_acc)

    x = x_ref[...]
    v = v_ref[...]
    if mask_tail:
        # Ragged feature dim: zero out the out-of-bounds tail of the last K
        # tile (select, so even NaN garbage from the partial DMA is killed).
        valid = d_total - k * tk
        cmask = jax.lax.broadcasted_iota(jnp.int32, x.shape, 1) < valid
        x = jnp.where(cmask, x, 0.0)
        rmask = jax.lax.broadcasted_iota(jnp.int32, v.shape, 0) < valid
        v = jnp.where(rmask, v, 0.0)

    xv_acc[...] += jnp.dot(x, v, preferred_element_type=jnp.float32, precision=_HI)
    x2v2_acc[...] += jnp.dot(x * x, v * v, preferred_element_type=jnp.float32,
                             precision=_HI)

    @pl.when(k == nk - 1)
    def _():
        res = 0.5 * (xv_acc[...] * xv_acc[...] - x2v2_acc[...])
        o_ref[...] = res[:, : o_ref.shape[1]].astype(o_ref.dtype)


# ------------------------------- Wrapper -------------------------------------
@functools.partial(jax.jit, static_argnames=("block_b",))
def fm_forward(x, v, *, block_b=4096):
    B, D = x.shape
    Dv, L = v.shape
    assert D == Dv

    # Lane-align the latent (N) dim of the weight for the in-VMEM matmul.
    # Weight-only pad (cheap, once per call); padded columns contribute 0 and
    # are never stored.
    L_pad = _round_up(max(L, 128), 128)
    v_p = jnp.pad(v, ((0, 0), (0, L_pad - L))) if L_pad != L else v

    budget = _vmem_budget_bytes()
    isz = 4  # f32 bytes
    out_shape = jax.ShapeDtypeStruct((B, L), jnp.float32)
    cost = pl.CostEstimate(
        flops=4 * B * D * L_pad,
        transcendentals=0,
        bytes_accessed=isz * (B * D + D * L_pad + B * L),
    )

    # ------------- Path A: v resident in VMEM, batch-tiled stream -------------
    def resident_fits(tb):
        # 2x double-buffered x tiles + single-buffered resident v
        # + 2x double-buffered output tiles.
        return isz * (2 * tb * D + D * L_pad + 2 * tb * L) <= budget

    TB = max(8, min(_round_up(block_b, 8), _round_up(B, 8)))
    while TB > 128 and not resident_fits(TB):
        TB = _round_up(TB // 2, 8)

    if resident_fits(TB):
        grid = (pl.cdiv(B, TB),)  # partial last tile handled by Pallas (no x pad)
        return pl.pallas_call(
            _fm_resident_kernel,
            out_shape=out_shape,
            grid=grid,
            in_specs=[
                pl.BlockSpec((TB, D), lambda i: (i, 0)),               # streamed x
                pl.BlockSpec((D, L_pad), lambda i: (0, 0),             # resident v
                             pipeline_mode=pl.Buffered(1)),            # single buffer
            ],
            out_specs=pl.BlockSpec((TB, L), lambda i: (i, 0)),         # narrow store
            compiler_params=pltpu.CompilerParams(
                dimension_semantics=("parallel",),                     # v7x megacore
                vmem_limit_bytes=budget,
            ),
            cost_estimate=cost,
        )(x, v_p)

    # ------------- Path B: K-split over the feature dim (huge D) --------------
    TK = 512
    TBk = max(8, min(1024, _round_up(B, 8)))
    grid = (pl.cdiv(B, TBk), pl.cdiv(D, TK))
    mask_tail = (D % TK) != 0
    kernel = functools.partial(_fm_ksplit_kernel, d_total=D, tk=TK,
                               mask_tail=mask_tail)
    return pl.pallas_call(
        kernel,
        out_shape=out_shape,
        grid=grid,
        in_specs=[
            pl.BlockSpec((TBk, TK), lambda i, k: (i, k)),
            pl.BlockSpec((TK, L_pad), lambda i, k: (k, 0)),
        ],
        out_specs=pl.BlockSpec((TBk, L), lambda i, k: (i, 0)),
        scratch_shapes=[
            pltpu.VMEM((TBk, L_pad), jnp.float32),   # sum(x v) accumulator
            pltpu.VMEM((TBk, L_pad), jnp.float32),   # sum(x^2 v^2) accumulator
        ],
        compiler_params=pltpu.CompilerParams(
            dimension_semantics=("parallel", "arbitrary"),
            vmem_limit_bytes=budget,
        ),
        cost_estimate=cost,
    )(x, v_p)


def fm_reference(x, v):
    # f32 reference with explicit HIGHEST precision (parity with PyTorch f32).
    squared_sum = jnp.square(jnp.dot(x, v, precision=_HI))
    sum_of_squares = jnp.dot(jnp.square(x), jnp.square(v), precision=_HI)
    return 0.5 * (squared_sum - sum_of_squares)


if __name__ == "__main__":
    key = jax.random.PRNGKey(0)
    kx, kv, kx2 = jax.random.split(key, 3)

    # Small shapes consistent with the module: x [batch, input_dim], v [input_dim, latent_dim].
    batch, input_dim, latent_dim = 8, 32, 16
    x = jax.random.normal(kx, (batch, input_dim), dtype=jnp.float32)
    v = jax.random.normal(kv, (input_dim, latent_dim), dtype=jnp.float32)  # torch.randn-style init

    out = jax.block_until_ready(fm_forward(x, v))
    ref = fm_reference(x, v)
    assert out.shape == (batch, latent_dim)
    assert jnp.allclose(out, ref, atol=1e-4, rtol=1e-4), "mismatch vs reference"

    # Ragged batch (not a multiple of the tile): exercises the no-pad
    # partial-block path (grid of 2, masked writeback on the last tile).
    b2 = 13
    x2 = jax.random.normal(kx2, (b2, input_dim), dtype=jnp.float32)
    out2 = jax.block_until_ready(fm_forward(x2, v, block_b=8))
    ref2 = fm_reference(x2, v)
    assert out2.shape == (b2, latent_dim)
    assert jnp.allclose(out2, ref2, atol=1e-4, rtol=1e-4), "ragged-batch mismatch"

    print("KERNEL_OK")
</pallas_src>

<mosaic_0001>
module attributes {stable_mosaic.version = 11 : i64} {
  func.func @_fm_resident_kernel(%arg0: i32, %arg1: memref<8x32xf32, #tpu.memory_space<vmem>>, %arg2: memref<32x128xf32, #tpu.memory_space<vmem>>, %arg3: memref<8x16xf32, #tpu.memory_space<vmem>>) attributes {dimension_semantics = [#tpu.dimension_semantics<parallel>], iteration_bounds = array<i64: 1>, scalar_prefetch = 0 : i64, scratch_operands = 0 : i64, tpu.core_type = #tpu.core_type<tc>, window_params = [{transform_indices = @transform_0, window_bounds = array<i64: 8, 32>}, {pipeline_mode = #tpu.pipeline_mode<synchronous>, transform_indices = @transform_1, window_bounds = array<i64: 32, 128>}, {transform_indices = @transform_2, window_bounds = array<i64: 8, 16>}]} {
    %c0 = arith.constant 0 : index
    %c0_0 = arith.constant 0 : index
    %0 = vector.load %arg1[%c0, %c0_0] : memref<8x32xf32, #tpu.memory_space<vmem>>, vector<8x32xf32>
    %c0_1 = arith.constant 0 : index
    %c0_2 = arith.constant 0 : index
    %1 = vector.load %arg2[%c0_1, %c0_2] : memref<32x128xf32, #tpu.memory_space<vmem>>, vector<32x128xf32>
    %cst = arith.constant dense<0.000000e+00> : vector<8x128xf32>
    %2 = tpu.matmul %0, %1, %cst {dimension_numbers = #tpu.dot_dimension_numbers<[1], [0], [0], [1], [0, 0, 1, 1], [], []>, precision = #tpu.contract_precision<fp32>} : vector<8x32xf32>, vector<32x128xf32>, vector<8x128xf32> -> vector<8x128xf32>
    %3 = arith.mulf %0, %0 : vector<8x32xf32>
    %4 = arith.mulf %1, %1 : vector<32x128xf32>
    %cst_3 = arith.constant dense<0.000000e+00> : vector<8x128xf32>
    %5 = tpu.matmul %3, %4, %cst_3 {dimension_numbers = #tpu.dot_dimension_numbers<[1], [0], [0], [1], [0, 0, 1, 1], [], []>, precision = #tpu.contract_precision<fp32>} : vector<8x32xf32>, vector<32x128xf32>, vector<8x128xf32> -> vector<8x128xf32>
    %6 = arith.mulf %2, %2 : vector<8x128xf32>
    %7 = arith.subf %6, %5 : vector<8x128xf32>
    %cst_4 = arith.constant 5.000000e-01 : f32
    %8 = vector.broadcast %cst_4 : f32 to vector<8x128xf32>
    %9 = arith.mulf %8, %7 : vector<8x128xf32>
    %10 = vector.extract_strided_slice %9 {offsets = [0, 0], sizes = [8, 16], strides = [1, 1]} : vector<8x128xf32> to vector<8x16xf32>
    %c0_5 = arith.constant 0 : index
    %c0_6 = arith.constant 0 : index
    %11 = vector.load %arg3[%c0_5, %c0_6] : memref<8x16xf32, #tpu.memory_space<vmem>>, vector<8x16xf32>
    tpu.vector_store %arg3[%c0_5, %c0_6], %10 {strides = array<i32>} : memref<8x16xf32, #tpu.memory_space<vmem>>, vector<8x16xf32>,
    return
  }
  func.func @transform_0(%arg0: i32) -> (i32, i32) {
    %c0_i32 = arith.constant 0 : i32
    %c0_i32_0 = arith.constant 0 : i32
    return %arg0, %c0_i32 : i32, i32
  }
  func.func @transform_1(%arg0: i32) -> (i32, i32) {
    %c0_i32 = arith.constant 0 : i32
    %c0_i32_0 = arith.constant 0 : i32
    %c0_i32_1 = arith.constant 0 : i32
    return %c0_i32, %c0_i32_0 : i32, i32
  }
  func.func @transform_2(%arg0: i32) -> (i32, i32) {
    %c0_i32 = arith.constant 0 : i32
    %c0_i32_0 = arith.constant 0 : i32
    return %arg0, %c0_i32 : i32, i32
  }
}

</mosaic_0001>

<llo_original>
// kernel: fm_forward.1
$region0: #{fm_forward.1}
  #allocation0 [shape = 'u32[]', space=smem, size = 0x4, offset = 0x4, fixed_abs, tag = 'smem constant byte address 0x4 - core index']
  #allocation1 [shape = 'u32[144,128]{1,0:T(1,128)}', space=vmem, size = 0x12000, scoped, tag = 'internal scratch']
  %s0 = inlined_call_operand.vmem [shape: f32[8,32], index: 0, kind: input, shape index: {}]
  %s1 = inlined_call_operand.vmem [shape: f32[32,128], index: 1, kind: input, shape index: {}]
  %s2 = inlined_call_operand.hbm [shape: f32[8,16], index: 2, kind: output, shape index: {}]
  %s3 = sld [smem:[#allocation0]]
  $region18: #{fm_forward.1} parent=0
    _
  %s5 = ssub.s32 1, %s3
  %s6 = scalar_select 0, %s5, %s3
  $region1: #{fm_forward.1} parent=0
    #allocation2 [shape = 'u8[4096]{0}', space=vmem, size = 0x1000, scoped, tag = 'output window, operand 0, single buffered']
    #allocation3 [shape = 's32[1]{0}', space=sflag, size = 0x4, scoped, tag = 'scoped memory for fm_forward.1']
    %7 = vsyncpa [#allocation3], 0
    // Predicated region
    $region2: #{fm_forward.1} parent=1 // pred_check
      _
    $region3: #{fm_forward.1} parent=1 // pred_check_branch
      %9 = sbr.rel (0) target = $region5
    $region4: #{fm_forward.1} parent=1 // pred_region
      _
    $region5: #{fm_forward.1} parent=1 // pred_fallthru
      _
    // Predicated region
    $region6: #{fm_forward.1} parent=1 // pred_check
      _
    $region7: #{fm_forward.1} parent=1 // pred_check_branch
      %11 = sbr.rel (0) target = $region9
    $region8: #{fm_forward.1} parent=1 // pred_region
      _
    $region9: #{fm_forward.1} parent=1 // pred_fallthru
      _
    %v12 = vld [vmem:[%s0] sm:$0xff]
    %v13 = vld [vmem:[%s1] sm:$0xff]
    %v14 = vld [vmem:[%s1 + $0x8] sm:$0xff]
    %v15 = vld [vmem:[%s1 + $0x10] sm:$0xff]
    %v16 = vld [vmem:[%s1 + $0x18] sm:$0xff]
    %vm17 = vcmask 261120
    %v19 = vsel %vm17, %v12, 0
    %21 = vmatprep.subr.mxu0 0.0
    %v22 = vand.u32 %v13, 4294901760
    %23 = vmatpush1.msra.mxu0 %v22
    %24 = vmatprep.subr.mxu0 0.0
    %v25 = vand.u32 %v14, 4294901760
    %26 = vmatpush1.msra.mxu0 %v25
    %27 = vmatprep.subr.mxu0 0.0
    %v28 = vand.u32 %v15, 4294901760
    %29 = vmatpush1.msra.mxu0 %v28
    %30 = vmatprep.subr.mxu0 0.0
    %v31 = vand.u32 %v16, 4294901760
    %32 = vmatpush1.msra.mxu0 %v31
    %33 = vmatprep.subr.mxu0 0.0
    %34 = vmatpush1.msra.mxu0 0.0
    %35 = vmatprep.subr.mxu0 0.0
    %36 = vmatpush1.msra.mxu0 0.0
    %37 = vmatprep.subr.mxu0 0.0
    %38 = vmatpush1.msra.mxu0 0.0
    %39 = vmatprep.subr.mxu0 0.0
    %40 = vmatpush1.msra.mxu0 0.0
    %41 = vmatprep.subr.mxu0 0.0
    %42 = vmatpush1.msra.mxu0 0.0
    %43 = vmatprep.subr.mxu0 0.0
    %44 = vmatpush1.msra.mxu0 0.0
    %45 = vmatprep.subr.mxu0 0.0
    %46 = vmatpush1.msra.mxu0 0.0
    %47 = vmatprep.subr.mxu0 0.0
    %48 = vmatpush1.msra.mxu0 0.0
    %49 = vmatprep.subr.mxu0 0.0
    %50 = vmatpush1.msra.mxu0 0.0
    %51 = vmatprep.subr.mxu0 0.0
    %52 = vmatpush1.msra.mxu0 0.0
    %53 = vmatprep.subr.mxu0 0.0
    %54 = vmatpush1.msra.mxu0 0.0
    %55 = vmatprep.subr.mxu0 0.0
    %56 = vmatpush1.msra.mxu0 0.0
    %57 = vmatprep.subr.mxu0 0.0
    %58 = vmatpush1.msra.mxu0 0.0
    %59 = vmatprep.subr.mxu0 0.0
    %60 = vmatpush1.msra.mxu0 0.0
    %61 = vmatprep.subr.mxu0 0.0
    %62 = vmatpush1.msra.mxu0 0.0
    %63 = vmatprep.subr.mxu0 0.0
    %64 = vmatpush1.msra.mxu0 0.0
    %65 = vmatprep.subr.mxu0 0.0
    %66 = vmatpush1.msra.mxu0 0.0
    %67 = vmatprep.subr.mxu0 0.0
    %68 = vmatpush1.msra.mxu0 0.0
    %69 = vmatprep.subr.mxu0 0.0
    %70 = vmatpush1.msra.mxu0 0.0
    %71 = vmatprep.subr.mxu0 0.0
    %72 = vmatpush1.msra.mxu0 0.0
    %73 = vmatprep.subr.mxu0 0.0
    %74 = vmatpush1.msra.mxu0 0.0
    %75 = vmatprep.subr.mxu0 0.0
    %76 = vmatpush1.msra.mxu0 0.0
    %77 = vmatprep.subr.mxu0 0.0
    %78 = vmatpush1.msra.mxu0 0.0
    %79 = vmatprep.subr.mxu0 0.0
    %80 = vmatpush1.msra.mxu0 0.0
    %81 = vmatprep.subr.mxu0 0.0
    %82 = vmatpush1.msra.mxu0 0.0
    %83 = vmatprep.subr.mxu0 0.0
    %84 = vmatpush1.msra.mxu0 0.0
    %85 = vmatprep.subr.mxu0 0.0
    %86 = vmatpush1.msra.mxu0 0.0
    %87 = vmatprep.subr.mxu0 0.0
    %88 = vmatpush1.msra.mxu0 0.0
    %89 = vmatprep.mubr.f32.mxu0 0.0
    %v90 = vand.u32 %v19, 4294901760
    %v91 = vsub.f32 %v19, %v90
    %v92 = vand.u32 %v91, 4294901760
    %v93 = vsub.f32 %v91, %v92
    %v94 = vand.u32 %v93, 4294901760
    %95 = vmatmul.mubr.f32.gmra.mrb[0].mxu0 %v94
    %v96 = vpop.f32.mrb[0].mxu0
    %v97 = vadd.f32 0.0, %v96
    %v98 = vpop.f32.mrb[0].mxu0
    %99 = vdwg.mxu0
    %100 = vmatprep.subr.mxu0 0.0
    %v101 = vand.u32 %v13, 4294901760
    %v102 = vsub.f32 %v13, %v101
    %v103 = vand.u32 %v102, 4294901760
    %v104 = vsub.f32 %v102, %v103
    %v105 = vand.u32 %v104, 4294901760
    %106 = vmatpush1.msra.mxu0 %v105
    %107 = vmatprep.subr.mxu0 0.0
    %v108 = vand.u32 %v14, 4294901760
    %v109 = vsub.f32 %v14, %v108
    %v110 = vand.u32 %v109, 4294901760
    %v111 = vsub.f32 %v109, %v110
    %v112 = vand.u32 %v111, 4294901760
    %113 = vmatpush1.msra.mxu0 %v112
    %114 = vmatprep.subr.mxu0 0.0
    %v115 = vand.u32 %v15, 4294901760
    %v116 = vsub.f32 %v15, %v115
    %v117 = vand.u32 %v116, 4294901760
    %v118 = vsub.f32 %v116, %v117
    %v119 = vand.u32 %v118, 4294901760
    %120 = vmatpush1.msra.mxu0 %v119
    %121 = vmatprep.subr.mxu0 0.0
    %v122 = vand.u32 %v16, 4294901760
    %v123 = vsub.f32 %v16, %v122
    %v124 = vand.u32 %v123, 4294901760
    %v125 = vsub.f32 %v123, %v124
    %v126 = vand.u32 %v125, 4294901760
    %127 = vmatpush1.msra.mxu0 %v126
    %128 = vmatprep.subr.mxu0 0.0
    %129 = vmatpush1.msra.mxu0 0.0
    %130 = vmatprep.subr.mxu0 0.0
    %131 = vmatpush1.msra.mxu0 0.0
    %132 = vmatprep.subr.mxu0 0.0
    %133 = vmatpush1.msra.mxu0 0.0
    %134 = vmatprep.subr.mxu0 0.0
    %135 = vmatpush1.msra.mxu0 0.0
    %136 = vmatprep.subr.mxu0 0.0
    %137 = vmatpush1.msra.mxu0 0.0
    %138 = vmatprep.subr.mxu0 0.0
    %139 = vmatpush1.msra.mxu0 0.0
    %140 = vmatprep.subr.mxu0 0.0
    %141 = vmatpush1.msra.mxu0 0.0
    %142 = vmatprep.subr.mxu0 0.0
    %143 = vmatpush1.msra.mxu0 0.0
    %144 = vmatprep.subr.mxu0 0.0
    %145 = vmatpush1.msra.mxu0 0.0
    %146 = vmatprep.subr.mxu0 0.0
    %147 = vmatpush1.msra.mxu0 0.0
    %148 = vmatprep.subr.mxu0 0.0
    %149 = vmatpush1.msra.mxu0 0.0
    %150 = vmatprep.subr.mxu0 0.0
    %151 = vmatpush1.msra.mxu0 0.0
    %152 = vmatprep.subr.mxu0 0.0
    %153 = vmatpush1.msra.mxu0 0.0
    %154 = vmatprep.subr.mxu0 0.0
    %155 = vmatpush1.msra.mxu0 0.0
    %156 = vmatprep.subr.mxu0 0.0
    %157 = vmatpush1.msra.mxu0 0.0
    %158 = vmatprep.subr.mxu0 0.0
    %159 = vmatpush1.msra.mxu0 0.0
    %160 = vmatprep.subr.mxu0 0.0
    %161 = vmatpush1.msra.mxu0 0.0
    %162 = vmatprep.subr.mxu0 0.0
    %163 = vmatpush1.msra.mxu0 0.0
    %164 = vmatprep.subr.mxu0 0.0
    %165 = vmatpush1.msra.mxu0 0.0
    %166 = vmatprep.subr.mxu0 0.0
    %167 = vmatpush1.msra.mxu0 0.0
    %168 = vmatprep.subr.mxu0 0.0
    %169 = vmatpush1.msra.mxu0 0.0
    %170 = vmatprep.subr.mxu0 0.0
    %171 = vmatpush1.msra.mxu0 0.0
    %172 = vmatprep.subr.mxu0 0.0
    %173 = vmatpush1.msra.mxu0 0.0
    %174 = vmatprep.subr.mxu0 0.0
    %175 = vmatpush1.msra.mxu0 0.0
    %176 = vmatprep.subr.mxu0 0.0
    %177 = vmatpush1.msra.mxu0 0.0
    %178 = vmatprep.subr.mxu0 0.0
    %179 = vmatpush1.msra.mxu0 0.0
    %180 = vmatprep.subr.mxu0 0.0
    %181 = vmatpush1.msra.mxu0 0.0
    %182 = vmatprep.subr.mxu0 0.0
    %183 = vmatpush1.msra.mxu0 0.0
    %184 = vmatprep.mubr.f32.mxu0 0.0
    %v185 = vand.u32 %v19, 4294901760
    %186 = vmatmul.mubr.f32.gmra.mrb[0].mxu0 %v185
    %v187 = vpop.f32.mrb[0].mxu0
    %v188 = vadd.f32 %v97, %v187
    %v189 = vpop.f32.mrb[0].mxu0
    %190 = vdwg.mxu0
    %191 = vmatprep.subr.mxu0 0.0
    %v192 = vand.u32 %v13, 4294901760
    %v193 = vsub.f32 %v13, %v192
    %194 = vmatpush1.msra.mxu0 %v193
    %195 = vmatprep.subr.mxu0 0.0
    %v196 = vand.u32 %v14, 4294901760
    %v197 = vsub.f32 %v14, %v196
    %198 = vmatpush1.msra.mxu0 %v197
    %199 = vmatprep.subr.mxu0 0.0
    %v200 = vand.u32 %v15, 4294901760
    %v201 = vsub.f32 %v15, %v200
    %202 = vmatpush1.msra.mxu0 %v201
    %203 = vmatprep.subr.mxu0 0.0
    %v204 = vand.u32 %v16, 4294901760
    %v205 = vsub.f32 %v16, %v204
    %206 = vmatpush1.msra.mxu0 %v205
    %207 = vmatprep.subr.mxu0 0.0
    %208 = vmatpush1.msra.mxu0 0.0
    %209 = vmatprep.subr.mxu0 0.0
    %210 = vmatpush1.msra.mxu0 0.0
    %211 = vmatprep.subr.mxu0 0.0
    %212 = vmatpush1.msra.mxu0 0.0
    %213 = vmatprep.subr.mxu0 0.0
    %214 = vmatpush1.msra.mxu0 0.0
    %215 = vmatprep.subr.mxu0 0.0
    %216 = vmatpush1.msra.mxu0 0.0
    %217 = vmatprep.subr.mxu0 0.0
    %218 = vmatpush1.msra.mxu0 0.0
    %219 = vmatprep.subr.mxu0 0.0
    %220 = vmatpush1.msra.mxu0 0.0
    %221 = vmatprep.subr.mxu0 0.0
    %222 = vmatpush1.msra.mxu0 0.0
    %223 = vmatprep.subr.mxu0 0.0
    %224 = vmatpush1.msra.mxu0 0.0
    %225 = vmatprep.subr.mxu0 0.0
    %226 = vmatpush1.msra.mxu0 0.0
    %227 = vmatprep.subr.mxu0 0.0
    %228 = vmatpush1.msra.mxu0 0.0
    %229 = vmatprep.subr.mxu0 0.0
    %230 = vmatpush1.msra.mxu0 0.0
    %231 = vmatprep.subr.mxu0 0.0
    %232 = vmatpush1.msra.mxu0 0.0
    %233 = vmatprep.subr.mxu0 0.0
    %234 = vmatpush1.msra.mxu0 0.0
    %235 = vmatprep.subr.mxu0 0.0
    %236 = vmatpush1.msra.mxu0 0.0
    %237 = vmatprep.subr.mxu0 0.0
    %238 = vmatpush1.msra.mxu0 0.0
    %239 = vmatprep.subr.mxu0 0.0
    %240 = vmatpush1.msra.mxu0 0.0
    %241 = vmatprep.subr.mxu0 0.0
    %242 = vmatpush1.msra.mxu0 0.0
    %243 = vmatprep.subr.mxu0 0.0
    %244 = vmatpush1.msra.mxu0 0.0
    %245 = vmatprep.subr.mxu0 0.0
    %246 = vmatpush1.msra.mxu0 0.0
    %247 = vmatprep.subr.mxu0 0.0
    %248 = vmatpush1.msra.mxu0 0.0
    %249 = vmatprep.subr.mxu0 0.0
    %250 = vmatpush1.msra.mxu0 0.0
    %251 = vmatprep.subr.mxu0 0.0
    %252 = vmatpush1.msra.mxu0 0.0
    %253 = vmatprep.subr.mxu0 0.0
    %254 = vmatpush1.msra.mxu0 0.0
    %255 = vmatprep.subr.mxu0 0.0
    %256 = vmatpush1.msra.mxu0 0.0
    %257 = vmatprep.subr.mxu0 0.0
    %258 = vmatpush1.msra.mxu0 0.0
    %259 = vmatprep.subr.mxu0 0.0
    %260 = vmatpush1.msra.mxu0 0.0
    %261 = vmatprep.subr.mxu0 0.0
    %262 = vmatpush1.msra.mxu0 0.0
    %263 = vmatprep.mubr.f32.mxu0 0.0
    %v264 = vand.u32 %v19, 4294901760
    %v265 = vsub.f32 %v19, %v264
    %266 = vmatmul.mubr.f32.gmra.mrb[0].mxu0 %v265
    %v267 = vpop.f32.mrb[0].mxu0
    %v268 = vadd.f32 %v188, %v267
    %v269 = vpop.f32.mrb[0].mxu0
    %270 = vdwg.mxu0
    %271 = vmatprep.subr.mxu0 0.0
    %v272 = vand.u32 %v13, 4294901760
    %273 = vmatpush1.msra.mxu0 %v272
    %274 = vmatprep.subr.mxu0 0.0
    %v275 = vand.u32 %v14, 4294901760
    %276 = vmatpush1.msra.mxu0 %v275
    %277 = vmatprep.subr.mxu0 0.0
    %v278 = vand.u32 %v15, 4294901760
    %279 = vmatpush1.msra.mxu0 %v278
    %280 = vmatprep.subr.mxu0 0.0
    %v281 = vand.u32 %v16, 4294901760
    %282 = vmatpush1.msra.mxu0 %v281
    %283 = vmatprep.subr.mxu0 0.0
    %284 = vmatpush1.msra.mxu0 0.0
    %285 = vmatprep.subr.mxu0 0.0
    %286 = vmatpush1.msra.mxu0 0.0
    %287 = vmatprep.subr.mxu0 0.0
    %288 = vmatpush1.msra.mxu0 0.0
    %289 = vmatprep.subr.mxu0 0.0
    %290 = vmatpush1.msra.mxu0 0.0
    %291 = vmatprep.subr.mxu0 0.0
    %292 = vmatpush1.msra.mxu0 0.0
    %293 = vmatprep.subr.mxu0 0.0
    %294 = vmatpush1.msra.mxu0 0.0
    %295 = vmatprep.subr.mxu0 0.0
    %296 = vmatpush1.msra.mxu0 0.0
    %297 = vmatprep.subr.mxu0 0.0
    %298 = vmatpush1.msra.mxu0 0.0
    %299 = vmatprep.subr.mxu0 0.0
    %300 = vmatpush1.msra.mxu0 0.0
    %301 = vmatprep.subr.mxu0 0.0
    %302 = vmatpush1.msra.mxu0 0.0
    %303 = vmatprep.subr.mxu0 0.0
    %304 = vmatpush1.msra.mxu0 0.0
    %305 = vmatprep.subr.mxu0 0.0
    %306 = vmatpush1.msra.mxu0 0.0
    %307 = vmatprep.subr.mxu0 0.0
    %308 = vmatpush1.msra.mxu0 0.0
    %309 = vmatprep.subr.mxu0 0.0
    %310 = vmatpush1.msra.mxu0 0.0
    %311 = vmatprep.subr.mxu0 0.0
    %312 = vmatpush1.msra.mxu0 0.0
    %313 = vmatprep.subr.mxu0 0.0
    %314 = vmatpush1.msra.mxu0 0.0
    %315 = vmatprep.subr.mxu0 0.0
    %316 = vmatpush1.msra.mxu0 0.0
    %317 = vmatprep.subr.mxu0 0.0
    %318 = vmatpush1.msra.mxu0 0.0
    %319 = vmatprep.subr.mxu0 0.0
    %320 = vmatpush1.msra.mxu0 0.0
    %321 = vmatprep.subr.mxu0 0.0
    %322 = vmatpush1.msra.mxu0 0.0
    %323 = vmatprep.subr.mxu0 0.0
    %324 = vmatpush1.msra.mxu0 0.0
    %325 = vmatprep.subr.mxu0 0.0
    %326 = vmatpush1.msra.mxu0 0.0
    %327 = vmatprep.subr.mxu0 0.0
    %328 = vmatpush1.msra.mxu0 0.0
    %329 = vmatprep.subr.mxu0 0.0
    %330 = vmatpush1.msra.mxu0 0.0
    %331 = vmatprep.subr.mxu0 0.0
    %332 = vmatpush1.msra.mxu0 0.0
    %333 = vmatprep.subr.mxu0 0.0
    %334 = vmatpush1.msra.mxu0 0.0
    %335 = vmatprep.subr.mxu0 0.0
    %336 = vmatpush1.msra.mxu0 0.0
    %337 = vmatprep.subr.mxu0 0.0
    %338 = vmatpush1.msra.mxu0 0.0
    %339 = vmatprep.mubr.f32.mxu0 0.0
    %v340 = vand.u32 %v19, 4294901760
    %v341 = vsub.f32 %v19, %v340
    %v342 = vand.u32 %v341, 4294901760
    %343 = vmatmul.mubr.f32.gmra.mrb[0].mxu0 %v342
    %v344 = vpop.f32.mrb[0].mxu0
    %v345 = vadd.f32 %v268, %v344
    %v346 = vpop.f32.mrb[0].mxu0
    %347 = vdwg.mxu0
    %348 = vmatprep.subr.mxu0 0.0
    %v349 = vand.u32 %v13, 4294901760
    %v350 = vsub.f32 %v13, %v349
    %v351 = vand.u32 %v350, 4294901760
    %352 = vmatpush1.msra.mxu0 %v351
    %353 = vmatprep.subr.mxu0 0.0
    %v354 = vand.u32 %v14, 4294901760
    %v355 = vsub.f32 %v14, %v354
    %v356 = vand.u32 %v355, 4294901760
    %357 = vmatpush1.msra.mxu0 %v356
    %358 = vmatprep.subr.mxu0 0.0
    %v359 = vand.u32 %v15, 4294901760
    %v360 = vsub.f32 %v15, %v359
    %v361 = vand.u32 %v360, 4294901760
    %362 = vmatpush1.msra.mxu0 %v361
    %363 = vmatprep.subr.mxu0 0.0
    %v364 = vand.u32 %v16, 4294901760
    %v365 = vsub.f32 %v16, %v364
    %v366 = vand.u32 %v365, 4294901760
    %367 = vmatpush1.msra.mxu0 %v366
    %368 = vmatprep.subr.mxu0 0.0
    %369 = vmatpush1.msra.mxu0 0.0
    %370 = vmatprep.subr.mxu0 0.0
    %371 = vmatpush1.msra.mxu0 0.0
    %372 = vmatprep.subr.mxu0 0.0
    %373 = vmatpush1.msra.mxu0 0.0
    %374 = vmatprep.subr.mxu0 0.0
    %375 = vmatpush1.msra.mxu0 0.0
    %376 = vmatprep.subr.mxu0 0.0
    %377 = vmatpush1.msra.mxu0 0.0
    %378 = vmatprep.subr.mxu0 0.0
    %379 = vmatpush1.msra.mxu0 0.0
    %380 = vmatprep.subr.mxu0 0.0
    %381 = vmatpush1.msra.mxu0 0.0
    %382 = vmatprep.subr.mxu0 0.0
    %383 = vmatpush1.msra.mxu0 0.0
    %384 = vmatprep.subr.mxu0 0.0
    %385 = vmatpush1.msra.mxu0 0.0
    %386 = vmatprep.subr.mxu0 0.0
    %387 = vmatpush1.msra.mxu0 0.0
    %388 = vmatprep.subr.mxu0 0.0
    %389 = vmatpush1.msra.mxu0 0.0
    %390 = vmatprep.subr.mxu0 0.0
    %391 = vmatpush1.msra.mxu0 0.0
    %392 = vmatprep.subr.mxu0 0.0
    %393 = vmatpush1.msra.mxu0 0.0
    %394 = vmatprep.subr.mxu0 0.0
    %395 = vmatpush1.msra.mxu0 0.0
    %396 = vmatprep.subr.mxu0 0.0
    %397 = vmatpush1.msra.mxu0 0.0
    %398 = vmatprep.subr.mxu0 0.0
    %399 = vmatpush1.msra.mxu0 0.0
    %400 = vmatprep.subr.mxu0 0.0
    %401 = vmatpush1.msra.mxu0 0.0
    %402 = vmatprep.subr.mxu0 0.0
    %403 = vmatpush1.msra.mxu0 0.0
    %404 = vmatprep.subr.mxu0 0.0
    %405 = vmatpush1.msra.mxu0 0.0
    %406 = vmatprep.subr.mxu0 0.0
    %407 = vmatpush1.msra.mxu0 0.0
    %408 = vmatprep.subr.mxu0 0.0
    %409 = vmatpush1.msra.mxu0 0.0
    %410 = vmatprep.subr.mxu0 0.0
    %411 = vmatpush1.msra.mxu0 0.0
    %412 = vmatprep.subr.mxu0 0.0
    %413 = vmatpush1.msra.mxu0 0.0
    %414 = vmatprep.subr.mxu0 0.0
    %415 = vmatpush1.msra.mxu0 0.0
    %416 = vmatprep.subr.mxu0 0.0
    %417 = vmatpush1.msra.mxu0 0.0
    %418 = vmatprep.subr.mxu0 0.0
    %419 = vmatpush1.msra.mxu0 0.0
    %420 = vmatprep.subr.mxu0 0.0
    %421 = vmatpush1.msra.mxu0 0.0
    %422 = vmatprep.subr.mxu0 0.0
    %423 = vmatpush1.msra.mxu0 0.0
    %424 = vmatprep.mubr.f32.mxu0 0.0
    %v425 = vand.u32 %v19, 4294901760
    %426 = vmatmul.mubr.f32.gmra.mrb[0].mxu0 %v425
    %v427 = vpop.f32.mrb[0].mxu0
    %v428 = vadd.f32 %v345, %v427
    %v429 = vpop.f32.mrb[0].mxu0
    %430 = vdwg.mxu0
    %431 = vmatprep.subr.mxu0 0.0
    %v432 = vand.u32 %v13, 4294901760
    %433 = vmatpush1.msra.mxu0 %v432
    %434 = vmatprep.subr.mxu0 0.0
    %v435 = vand.u32 %v14, 4294901760
    %436 = vmatpush1.msra.mxu0 %v435
    %437 = vmatprep.subr.mxu0 0.0
    %v438 = vand.u32 %v15, 4294901760
    %439 = vmatpush1.msra.mxu0 %v438
    %440 = vmatprep.subr.mxu0 0.0
    %v441 = vand.u32 %v16, 4294901760
    %442 = vmatpush1.msra.mxu0 %v441
    %443 = vmatprep.subr.mxu0 0.0
    %444 = vmatpush1.msra.mxu0 0.0
    %445 = vmatprep.subr.mxu0 0.0
    %446 = vmatpush1.msra.mxu0 0.0
    %447 = vmatprep.subr.mxu0 0.0
    %448 = vmatpush1.msra.mxu0 0.0
    %449 = vmatprep.subr.mxu0 0.0
    %450 = vmatpush1.msra.mxu0 0.0
    %451 = vmatprep.subr.mxu0 0.0
    %452 = vmatpush1.msra.mxu0 0.0
    %453 = vmatprep.subr.mxu0 0.0
    %454 = vmatpush1.msra.mxu0 0.0
    %455 = vmatprep.subr.mxu0 0.0
    %456 = vmatpush1.msra.mxu0 0.0
    %457 = vmatprep.subr.mxu0 0.0
    %458 = vmatpush1.msra.mxu0 0.0
    %459 = vmatprep.subr.mxu0 0.0
    %460 = vmatpush1.msra.mxu0 0.0
    %461 = vmatprep.subr.mxu0 0.0
    %462 = vmatpush1.msra.mxu0 0.0
    %463 = vmatprep.subr.mxu0 0.0
    %464 = vmatpush1.msra.mxu0 0.0
    %465 = vmatprep.subr.mxu0 0.0
    %466 = vmatpush1.msra.mxu0 0.0
    %467 = vmatprep.subr.mxu0 0.0
    %468 = vmatpush1.msra.mxu0 0.0
    %469 = vmatprep.subr.mxu0 0.0
    %470 = vmatpush1.msra.mxu0 0.0
    %471 = vmatprep.subr.mxu0 0.0
    %472 = vmatpush1.msra.mxu0 0.0
    %473 = vmatprep.subr.mxu0 0.0
    %474 = vmatpush1.msra.mxu0 0.0
    %475 = vmatprep.subr.mxu0 0.0
    %476 = vmatpush1.msra.mxu0 0.0
    %477 = vmatprep.subr.mxu0 0.0
    %478 = vmatpush1.msra.mxu0 0.0
    %479 = vmatprep.subr.mxu0 0.0
    %480 = vmatpush1.msra.mxu0 0.0
    %481 = vmatprep.subr.mxu0 0.0
    %482 = vmatpush1.msra.mxu0 0.0
    %483 = vmatprep.subr.mxu0 0.0
    %484 = vmatpush1.msra.mxu0 0.0
    %485 = vmatprep.subr.mxu0 0.0
    %486 = vmatpush1.msra.mxu0 0.0
    %487 = vmatprep.subr.mxu0 0.0
    %488 = vmatpush1.msra.mxu0 0.0
    %489 = vmatprep.subr.mxu0 0.0
    %490 = vmatpush1.msra.mxu0 0.0
    %491 = vmatprep.subr.mxu0 0.0
    %492 = vmatpush1.msra.mxu0 0.0
    %493 = vmatprep.subr.mxu0 0.0
    %494 = vmatpush1.msra.mxu0 0.0
    %495 = vmatprep.subr.mxu0 0.0
    %496 = vmatpush1.msra.mxu0 0.0
    %497 = vmatprep.subr.mxu0 0.0
    %498 = vmatpush1.msra.mxu0 0.0
    %499 = vmatprep.mubr.f32.mxu0 0.0
    %v500 = vand.u32 %v19, 4294901760
    %501 = vmatmul.mubr.f32.gmra.mrb[0].mxu0 %v500
    %v502 = vpop.f32.mrb[0].mxu0
    %v503 = vadd.f32 %v428, %v502
    %v504 = vpop.f32.mrb[0].mxu0
    %505 = vdwg.mxu0
    %v506 = vmul.f32 %v12, %v12
    %v507 = vmul.f32 %v13, %v13
    %v508 = vmul.f32 %v14, %v14
    %v509 = vmul.f32 %v15, %v15
    %v510 = vmul.f32 %v16, %v16
    %v512 = vsel %vm17, %v506, 0
    %514 = vmatprep.subr.mxu0 0.0
    %v515 = vand.u32 %v507, 4294901760
    %516 = vmatpush1.msra.mxu0 %v515
    %517 = vmatprep.subr.mxu0 0.0
    %v518 = vand.u32 %v508, 4294901760
    %519 = vmatpush1.msra.mxu0 %v518
    %520 = vmatprep.subr.mxu0 0.0
    %v521 = vand.u32 %v509, 4294901760
    %522 = vmatpush1.msra.mxu0 %v521
    %523 = vmatprep.subr.mxu0 0.0
    %v524 = vand.u32 %v510, 4294901760
    %525 = vmatpush1.msra.mxu0 %v524
    %526 = vmatprep.subr.mxu0 0.0
    %527 = vmatpush1.msra.mxu0 0.0
    %528 = vmatprep.subr.mxu0 0.0
    %529 = vmatpush1.msra.mxu0 0.0
    %530 = vmatprep.subr.mxu0 0.0
    %531 = vmatpush1.msra.mxu0 0.0
    %532 = vmatprep.subr.mxu0 0.0
    %533 = vmatpush1.msra.mxu0 0.0
    %534 = vmatprep.subr.mxu0 0.0
    %535 = vmatpush1.msra.mxu0 0.0
    %536 = vmatprep.subr.mxu0 0.0
    %537 = vmatpush1.msra.mxu0 0.0
    %538 = vmatprep.subr.mxu0 0.0
    %539 = vmatpush1.msra.mxu0 0.0
    %540 = vmatprep.subr.mxu0 0.0
    %541 = vmatpush1.msra.mxu0 0.0
    %542 = vmatprep.subr.mxu0 0.0
    %543 = vmatpush1.msra.mxu0 0.0
    %544 = vmatprep.subr.mxu0 0.0
    %545 = vmatpush1.msra.mxu0 0.0
    %546 = vmatprep.subr.mxu0 0.0
    %547 = vmatpush1.msra.mxu0 0.0
    %548 = vmatprep.subr.mxu0 0.0
    %549 = vmatpush1.msra.mxu0 0.0
    %550 = vmatprep.subr.mxu0 0.0
    %551 = vmatpush1.msra.mxu0 0.0
    %552 = vmatprep.subr.mxu0 0.0
    %553 = vmatpush1.msra.mxu0 0.0
    %554 = vmatprep.subr.mxu0 0.0
    %555 = vmatpush1.msra.mxu0 0.0
    %556 = vmatprep.subr.mxu0 0.0
    %557 = vmatpush1.msra.mxu0 0.0
    %558 = vmatprep.subr.mxu0 0.0
    %559 = vmatpush1.msra.mxu0 0.0
    %560 = vmatprep.subr.mxu0 0.0
    %561 = vmatpush1.msra.mxu0 0.0
    %562 = vmatprep.subr.mxu0 0.0
    %563 = vmatpush1.msra.mxu0 0.0
    %564 = vmatprep.subr.mxu0 0.0
    %565 = vmatpush1.msra.mxu0 0.0
    %566 = vmatprep.subr.mxu0 0.0
    %567 = vmatpush1.msra.mxu0 0.0
    %568 = vmatprep.subr.mxu0 0.0
    %569 = vmatpush1.msra.mxu0 0.0
    %570 = vmatprep.subr.mxu0 0.0
    %571 = vmatpush1.msra.mxu0 0.0
    %572 = vmatprep.subr.mxu0 0.0
    %573 = vmatpush1.msra.mxu0 0.0
    %574 = vmatprep.subr.mxu0 0.0
    %575 = vmatpush1.msra.mxu0 0.0
    %576 = vmatprep.subr.mxu0 0.0
    %577 = vmatpush1.msra.mxu0 0.0
    %578 = vmatprep.subr.mxu0 0.0
    %579 = vmatpush1.msra.mxu0 0.0
    %580 = vmatprep.subr.mxu0 0.0
    %581 = vmatpush1.msra.mxu0 0.0
    %582 = vmatprep.mubr.f32.mxu0 0.0
    %v583 = vand.u32 %v512, 4294901760
    %v584 = vsub.f32 %v512, %v583
    %v585 = vand.u32 %v584, 4294901760
    %v586 = vsub.f32 %v584, %v585
    %v587 = vand.u32 %v586, 4294901760
    %588 = vmatmul.mubr.f32.gmra.mrb[0].mxu0 %v587
    %v589 = vpop.f32.mrb[0].mxu0
    %v590 = vadd.f32 0.0, %v589
    %v591 = vpop.f32.mrb[0].mxu0
    %592 = vdwg.mxu0
    %593 = vmatprep.subr.mxu0 0.0
    %v594 = vand.u32 %v507, 4294901760
    %v595 = vsub.f32 %v507, %v594
    %v596 = vand.u32 %v595, 4294901760
    %v597 = vsub.f32 %v595, %v596
    %v598 = vand.u32 %v597, 4294901760
    %599 = vmatpush1.msra.mxu0 %v598
    %600 = vmatprep.subr.mxu0 0.0
    %v601 = vand.u32 %v508, 4294901760
    %v602 = vsub.f32 %v508, %v601
    %v603 = vand.u32 %v602, 4294901760
    %v604 = vsub.f32 %v602, %v603
    %v605 = vand.u32 %v604, 4294901760
    %606 = vmatpush1.msra.mxu0 %v605
    %607 = vmatprep.subr.mxu0 0.0
    %v608 = vand.u32 %v509, 4294901760
    %v609 = vsub.f32 %v509, %v608
    %v610 = vand.u32 %v609, 4294901760
    %v611 = vsub.f32 %v609, %v610
    %v612 = vand.u32 %v611, 4294901760
    %613 = vmatpush1.msra.mxu0 %v612
    %614 = vmatprep.subr.mxu0 0.0
    %v615 = vand.u32 %v510, 4294901760
    %v616 = vsub.f32 %v510, %v615
    %v617 = vand.u32 %v616, 4294901760
    %v618 = vsub.f32 %v616, %v617
    %v619 = vand.u32 %v618, 4294901760
    %620 = vmatpush1.msra.mxu0 %v619
    %621 = vmatprep.subr.mxu0 0.0
    %622 = vmatpush1.msra.mxu0 0.0
    %623 = vmatprep.subr.mxu0 0.0
    %624 = vmatpush1.msra.mxu0 0.0
    %625 = vmatprep.subr.mxu0 0.0
    %626 = vmatpush1.msra.mxu0 0.0
    %627 = vmatprep.subr.mxu0 0.0
    %628 = vmatpush1.msra.mxu0 0.0
    %629 = vmatprep.subr.mxu0 0.0
    %630 = vmatpush1.msra.mxu0 0.0
    %631 = vmatprep.subr.mxu0 0.0
    %632 = vmatpush1.msra.mxu0 0.0
    %633 = vmatprep.subr.mxu0 0.0
    %634 = vmatpush1.msra.mxu0 0.0
    %635 = vmatprep.subr.mxu0 0.0
    %636 = vmatpush1.msra.mxu0 0.0
    %637 = vmatprep.subr.mxu0 0.0
    %638 = vmatpush1.msra.mxu0 0.0
    %639 = vmatprep.subr.mxu0 0.0
    %640 = vmatpush1.msra.mxu0 0.0
    %641 = vmatprep.subr.mxu0 0.0
    %642 = vmatpush1.msra.mxu0 0.0
    %643 = vmatprep.subr.mxu0 0.0
    %644 = vmatpush1.msra.mxu0 0.0
    %645 = vmatprep.subr.mxu0 0.0
    %646 = vmatpush1.msra.mxu0 0.0
    %647 = vmatprep.subr.mxu0 0.0
    %648 = vmatpush1.msra.mxu0 0.0
    %649 = vmatprep.subr.mxu0 0.0
    %650 = vmatpush1.msra.mxu0 0.0
    %651 = vmatprep.subr.mxu0 0.0
    %652 = vmatpush1.msra.mxu0 0.0
    %653 = vmatprep.subr.mxu0 0.0
    %654 = vmatpush1.msra.mxu0 0.0
    %655 = vmatprep.subr.mxu0 0.0
    %656 = vmatpush1.msra.mxu0 0.0
    %657 = vmatprep.subr.mxu0 0.0
    %658 = vmatpush1.msra.mxu0 0.0
    %659 = vmatprep.subr.mxu0 0.0
    %660 = vmatpush1.msra.mxu0 0.0
    %661 = vmatprep.subr.mxu0 0.0
    %662 = vmatpush1.msra.mxu0 0.0
    %663 = vmatprep.subr.mxu0 0.0
    %664 = vmatpush1.msra.mxu0 0.0
    %665 = vmatprep.subr.mxu0 0.0
    %666 = vmatpush1.msra.mxu0 0.0
    %667 = vmatprep.subr.mxu0 0.0
    %668 = vmatpush1.msra.mxu0 0.0
    %669 = vmatprep.subr.mxu0 0.0
    %670 = vmatpush1.msra.mxu0 0.0
    %671 = vmatprep.subr.mxu0 0.0
    %672 = vmatpush1.msra.mxu0 0.0
    %673 = vmatprep.subr.mxu0 0.0
    %674 = vmatpush1.msra.mxu0 0.0
    %675 = vmatprep.subr.mxu0 0.0
    %676 = vmatpush1.msra.mxu0 0.0
    %677 = vmatprep.mubr.f32.mxu0 0.0
    %v678 = vand.u32 %v512, 4294901760
    %679 = vmatmul.mubr.f32.gmra.mrb[0].mxu0 %v678
    %v680 = vpop.f32.mrb[0].mxu0
    %v681 = vadd.f32 %v590, %v680
    %v682 = vpop.f32.mrb[0].mxu0
    %683 = vdwg.mxu0
    %684 = vmatprep.subr.mxu0 0.0
    %v685 = vand.u32 %v507, 4294901760
    %v686 = vsub.f32 %v507, %v685
    %687 = vmatpush1.msra.mxu0 %v686
    %688 = vmatprep.subr.mxu0 0.0
    %v689 = vand.u32 %v508, 4294901760
    %v690 = vsub.f32 %v508, %v689
    %691 = vmatpush1.msra.mxu0 %v690
    %692 = vmatprep.subr.mxu0 0.0
    %v693 = vand.u32 %v509, 4294901760
    %v694 = vsub.f32 %v509, %v693
    %695 = vmatpush1.msra.mxu0 %v694
    %696 = vmatprep.subr.mxu0 0.0
    %v697 = vand.u32 %v510, 4294901760
    %v698 = vsub.f32 %v510, %v697
    %699 = vmatpush1.msra.mxu0 %v698
    %700 = vmatprep.subr.mxu0 0.0
    %701 = vmatpush1.msra.mxu0 0.0
    %702 = vmatprep.subr.mxu0 0.0
    %703 = vmatpush1.msra.mxu0 0.0
    %704 = vmatprep.subr.mxu0 0.0
    %705 = vmatpush1.msra.mxu0 0.0
    %706 = vmatprep.subr.mxu0 0.0
    %707 = vmatpush1.msra.mxu0 0.0
    %708 = vmatprep.subr.mxu0 0.0
    %709 = vmatpush1.msra.mxu0 0.0
    %710 = vmatprep.subr.mxu0 0.0
    %711 = vmatpush1.msra.mxu0 0.0
    %712 = vmatprep.subr.mxu0 0.0
    %713 = vmatpush1.msra.mxu0 0.0
    %714 = vmatprep.subr.mxu0 0.0
    %715 = vmatpush1.msra.mxu0 0.0
    %716 = vmatprep.subr.mxu0 0.0
    %717 = vmatpush1.msra.mxu0 0.0
    %718 = vmatprep.subr.mxu0 0.0
    %719 = vmatpush1.msra.mxu0 0.0
    %720 = vmatprep.subr.mxu0 0.0
    %721 = vmatpush1.msra.mxu0 0.0
    %722 = vmatprep.subr.mxu0 0.0
    %723 = vmatpush1.msra.mxu0 0.0
    %724 = vmatprep.subr.mxu0 0.0
    %725 = vmatpush1.msra.mxu0 0.0
    %726 = vmatprep.subr.mxu0 0.0
    %727 = vmatpush1.msra.mxu0 0.0
    %728 = vmatprep.subr.mxu0 0.0
    %729 = vmatpush1.msra.mxu0 0.0
    %730 = vmatprep.subr.mxu0 0.0
    %731 = vmatpush1.msra.mxu0 0.0
    %732 = vmatprep.subr.mxu0 0.0
    %733 = vmatpush1.msra.mxu0 0.0
    %734 = vmatprep.subr.mxu0 0.0
    %735 = vmatpush1.msra.mxu0 0.0
    %736 = vmatprep.subr.mxu0 0.0
    %737 = vmatpush1.msra.mxu0 0.0
    %738 = vmatprep.subr.mxu0 0.0
    %739 = vmatpush1.msra.mxu0 0.0
    %740 = vmatprep.subr.mxu0 0.0
    %741 = vmatpush1.msra.mxu0 0.0
    %742 = vmatprep.subr.mxu0 0.0
    %743 = vmatpush1.msra.mxu0 0.0
    %744 = vmatprep.subr.mxu0 0.0
    %745 = vmatpush1.msra.mxu0 0.0
    %746 = vmatprep.subr.mxu0 0.0
    %747 = vmatpush1.msra.mxu0 0.0
    %748 = vmatprep.subr.mxu0 0.0
    %749 = vmatpush1.msra.mxu0 0.0
    %750 = vmatprep.subr.mxu0 0.0
    %751 = vmatpush1.msra.mxu0 0.0
    %752 = vmatprep.subr.mxu0 0.0
    %753 = vmatpush1.msra.mxu0 0.0
    %754 = vmatprep.subr.mxu0 0.0
    %755 = vmatpush1.msra.mxu0 0.0
    %756 = vmatprep.mubr.f32.mxu0 0.0
    %v757 = vand.u32 %v512, 4294901760
    %v758 = vsub.f32 %v512, %v757
    %759 = vmatmul.mubr.f32.gmra.mrb[0].mxu0 %v758
    %v760 = vpop.f32.mrb[0].mxu0
    %v761 = vadd.f32 %v681, %v760
    %v762 = vpop.f32.mrb[0].mxu0
    %763 = vdwg.mxu0
    %764 = vmatprep.subr.mxu0 0.0
    %v765 = vand.u32 %v507, 4294901760
    %766 = vmatpush1.msra.mxu0 %v765
    %767 = vmatprep.subr.mxu0 0.0
    %v768 = vand.u32 %v508, 4294901760
    %769 = vmatpush1.msra.mxu0 %v768
    %770 = vmatprep.subr.mxu0 0.0
    %v771 = vand.u32 %v509, 4294901760
    %772 = vmatpush1.msra.mxu0 %v771
    %773 = vmatprep.subr.mxu0 0.0
    %v774 = vand.u32 %v510, 4294901760
    %775 = vmatpush1.msra.mxu0 %v774
    %776 = vmatprep.subr.mxu0 0.0
    %777 = vmatpush1.msra.mxu0 0.0
    %778 = vmatprep.subr.mxu0 0.0
    %779 = vmatpush1.msra.mxu0 0.0
    %780 = vmatprep.subr.mxu0 0.0
    %781 = vmatpush1.msra.mxu0 0.0
    %782 = vmatprep.subr.mxu0 0.0
    %783 = vmatpush1.msra.mxu0 0.0
    %784 = vmatprep.subr.mxu0 0.0
    %785 = vmatpush1.msra.mxu0 0.0
    %786 = vmatprep.subr.mxu0 0.0
    %787 = vmatpush1.msra.mxu0 0.0
    %788 = vmatprep.subr.mxu0 0.0
    %789 = vmatpush1.msra.mxu0 0.0
    %790 = vmatprep.subr.mxu0 0.0
    %791 = vmatpush1.msra.mxu0 0.0
    %792 = vmatprep.subr.mxu0 0.0
    %793 = vmatpush1.msra.mxu0 0.0
    %794 = vmatprep.subr.mxu0 0.0
    %795 = vmatpush1.msra.mxu0 0.0
    %796 = vmatprep.subr.mxu0 0.0
    %797 = vmatpush1.msra.mxu0 0.0
    %798 = vmatprep.subr.mxu0 0.0
    %799 = vmatpush1.msra.mxu0 0.0
    %800 = vmatprep.subr.mxu0 0.0
    %801 = vmatpush1.msra.mxu0 0.0
    %802 = vmatprep.subr.mxu0 0.0
    %803 = vmatpush1.msra.mxu0 0.0
    %804 = vmatprep.subr.mxu0 0.0
    %805 = vmatpush1.msra.mxu0 0.0
    %806 = vmatprep.subr.mxu0 0.0
    %807 = vmatpush1.msra.mxu0 0.0
    %808 = vmatprep.subr.mxu0 0.0
    %809 = vmatpush1.msra.mxu0 0.0
    %810 = vmatprep.subr.mxu0 0.0
    %811 = vmatpush1.msra.mxu0 0.0
    %812 = vmatprep.subr.mxu0 0.0
    %813 = vmatpush1.msra.mxu0 0.0
    %814 = vmatprep.subr.mxu0 0.0
    %815 = vmatpush1.msra.mxu0 0.0
    %816 = vmatprep.subr.mxu0 0.0
    %817 = vmatpush1.msra.mxu0 0.0
    %818 = vmatprep.subr.mxu0 0.0
    %819 = vmatpush1.msra.mxu0 0.0
    %820 = vmatprep.subr.mxu0 0.0
    %821 = vmatpush1.msra.mxu0 0.0
    %822 = vmatprep.subr.mxu0 0.0
    %823 = vmatpush1.msra.mxu0 0.0
    %824 = vmatprep.subr.mxu0 0.0
    %825 = vmatpush1.msra.mxu0 0.0
    %826 = vmatprep.subr.mxu0 0.0
    %827 = vmatpush1.msra.mxu0 0.0
    %828 = vmatprep.subr.mxu0 0.0
    %829 = vmatpush1.msra.mxu0 0.0
    %830 = vmatprep.subr.mxu0 0.0
    %831 = vmatpush1.msra.mxu0 0.0
    %832 = vmatprep.mubr.f32.mxu0 0.0
    %v833 = vand.u32 %v512, 4294901760
    %v834 = vsub.f32 %v512, %v833
    %v835 = vand.u32 %v834, 4294901760
    %836 = vmatmul.mubr.f32.gmra.mrb[0].mxu0 %v835
    %v837 = vpop.f32.mrb[0].mxu0
    %v838 = vadd.f32 %v761, %v837
    %v839 = vpop.f32.mrb[0].mxu0
    %840 = vdwg.mxu0
    %841 = vmatprep.subr.mxu0 0.0
    %v842 = vand.u32 %v507, 4294901760
    %v843 = vsub.f32 %v507, %v842
    %v844 = vand.u32 %v843, 4294901760
    %845 = vmatpush1.msra.mxu0 %v844
    %846 = vmatprep.subr.mxu0 0.0
    %v847 = vand.u32 %v508, 4294901760
    %v848 = vsub.f32 %v508, %v847
    %v849 = vand.u32 %v848, 4294901760
    %850 = vmatpush1.msra.mxu0 %v849
    %851 = vmatprep.subr.mxu0 0.0
    %v852 = vand.u32 %v509, 4294901760
    %v853 = vsub.f32 %v509, %v852
    %v854 = vand.u32 %v853, 4294901760
    %855 = vmatpush1.msra.mxu0 %v854
    %856 = vmatprep.subr.mxu0 0.0
    %v857 = vand.u32 %v510, 4294901760
    %v858 = vsub.f32 %v510, %v857
    %v859 = vand.u32 %v858, 4294901760
    %860 = vmatpush1.msra.mxu0 %v859
    %861 = vmatprep.subr.mxu0 0.0
    %862 = vmatpush1.msra.mxu0 0.0
    %863 = vmatprep.subr.mxu0 0.0
    %864 = vmatpush1.msra.mxu0 0.0
    %865 = vmatprep.subr.mxu0 0.0
    %866 = vmatpush1.msra.mxu0 0.0
    %867 = vmatprep.subr.mxu0 0.0
    %868 = vmatpush1.msra.mxu0 0.0
    %869 = vmatprep.subr.mxu0 0.0
    %870 = vmatpush1.msra.mxu0 0.0
    %871 = vmatprep.subr.mxu0 0.0
    %872 = vmatpush1.msra.mxu0 0.0
    %873 = vmatprep.subr.mxu0 0.0
    %874 = vmatpush1.msra.mxu0 0.0
    %875 = vmatprep.subr.mxu0 0.0
    %876 = vmatpush1.msra.mxu0 0.0
    %877 = vmatprep.subr.mxu0 0.0
    %878 = vmatpush1.msra.mxu0 0.0
    %879 = vmatprep.subr.mxu0 0.0
    %880 = vmatpush1.msra.mxu0 0.0
    %881 = vmatprep.subr.mxu0 0.0
    %882 = vmatpush1.msra.mxu0 0.0
    %883 = vmatprep.subr.mxu0 0.0
    %884 = vmatpush1.msra.mxu0 0.0
    %885 = vmatprep.subr.mxu0 0.0
    %886 = vmatpush1.msra.mxu0 0.0
    %887 = vmatprep.subr.mxu0 0.0
    %888 = vmatpush1.msra.mxu0 0.0
    %889 = vmatprep.subr.mxu0 0.0
    %890 = vmatpush1.msra.mxu0 0.0
    %891 = vmatprep.subr.mxu0 0.0
    %892 = vmatpush1.msra.mxu0 0.0
    %893 = vmatprep.subr.mxu0 0.0
    %894 = vmatpush1.msra.mxu0 0.0
    %895 = vmatprep.subr.mxu0 0.0
    %896 = vmatpush1.msra.mxu0 0.0
    %897 = vmatprep.subr.mxu0 0.0
    %898 = vmatpush1.msra.mxu0 0.0
    %899 = vmatprep.subr.mxu0 0.0
    %900 = vmatpush1.msra.mxu0 0.0
    %901 = vmatprep.subr.mxu0 0.0
    %902 = vmatpush1.msra.mxu0 0.0
    %903 = vmatprep.subr.mxu0 0.0
    %904 = vmatpush1.msra.mxu0 0.0
    %905 = vmatprep.subr.mxu0 0.0
    %906 = vmatpush1.msra.mxu0 0.0
    %907 = vmatprep.subr.mxu0 0.0
    %908 = vmatpush1.msra.mxu0 0.0
    %909 = vmatprep.subr.mxu0 0.0
    %910 = vmatpush1.msra.mxu0 0.0
    %911 = vmatprep.subr.mxu0 0.0
    %912 = vmatpush1.msra.mxu0 0.0
    %913 = vmatprep.subr.mxu0 0.0
    %914 = vmatpush1.msra.mxu0 0.0
    %915 = vmatprep.subr.mxu0 0.0
    %916 = vmatpush1.msra.mxu0 0.0
    %917 = vmatprep.mubr.f32.mxu0 0.0
    %v918 = vand.u32 %v512, 4294901760
    %919 = vmatmul.mubr.f32.gmra.mrb[0].mxu0 %v918
    %v920 = vpop.f32.mrb[0].mxu0
    %v921 = vadd.f32 %v838, %v920
    %v922 = vpop.f32.mrb[0].mxu0
    %923 = vdwg.mxu0
    %924 = vmatprep.subr.mxu0 0.0
    %v925 = vand.u32 %v507, 4294901760
    %926 = vmatpush1.msra.mxu0 %v925
    %927 = vmatprep.subr.mxu0 0.0
    %v928 = vand.u32 %v508, 4294901760
    %929 = vmatpush1.msra.mxu0 %v928
    %930 = vmatprep.subr.mxu0 0.0
    %v931 = vand.u32 %v509, 4294901760
    %932 = vmatpush1.msra.mxu0 %v931
    %933 = vmatprep.subr.mxu0 0.0
    %v934 = vand.u32 %v510, 4294901760
    %935 = vmatpush1.msra.mxu0 %v934
    %936 = vmatprep.subr.mxu0 0.0
    %937 = vmatpush1.msra.mxu0 0.0
    %938 = vmatprep.subr.mxu0 0.0
    %939 = vmatpush1.msra.mxu0 0.0
    %940 = vmatprep.subr.mxu0 0.0
    %941 = vmatpush1.msra.mxu0 0.0
    %942 = vmatprep.subr.mxu0 0.0
    %943 = vmatpush1.msra.mxu0 0.0
    %944 = vmatprep.subr.mxu0 0.0
    %945 = vmatpush1.msra.mxu0 0.0
    %946 = vmatprep.subr.mxu0 0.0
    %947 = vmatpush1.msra.mxu0 0.0
    %948 = vmatprep.subr.mxu0 0.0
    %949 = vmatpush1.msra.mxu0 0.0
    %950 = vmatprep.subr.mxu0 0.0
    %951 = vmatpush1.msra.mxu0 0.0
    %952 = vmatprep.subr.mxu0 0.0
    %953 = vmatpush1.msra.mxu0 0.0
    %954 = vmatprep.subr.mxu0 0.0
    %955 = vmatpush1.msra.mxu0 0.0
    %956 = vmatprep.subr.mxu0 0.0
    %957 = vmatpush1.msra.mxu0 0.0
    %958 = vmatprep.subr.mxu0 0.0
    %959 = vmatpush1.msra.mxu0 0.0
    %960 = vmatprep.subr.mxu0 0.0
    %961 = vmatpush1.msra.mxu0 0.0
    %962 = vmatprep.subr.mxu0 0.0
    %963 = vmatpush1.msra.mxu0 0.0
    %964 = vmatprep.subr.mxu0 0.0
    %965 = vmatpush1.msra.mxu0 0.0
    %966 = vmatprep.subr.mxu0 0.0
    %967 = vmatpush1.msra.mxu0 0.0
    %968 = vmatprep.subr.mxu0 0.0
    %969 = vmatpush1.msra.mxu0 0.0
    %970 = vmatprep.subr.mxu0 0.0
    %971 = vmatpush1.msra.mxu0 0.0
    %972 = vmatprep.subr.mxu0 0.0
    %973 = vmatpush1.msra.mxu0 0.0
    %974 = vmatprep.subr.mxu0 0.0
    %975 = vmatpush1.msra.mxu0 0.0
    %976 = vmatprep.subr.mxu0 0.0
    %977 = vmatpush1.msra.mxu0 0.0
    %978 = vmatprep.subr.mxu0 0.0
    %979 = vmatpush1.msra.mxu0 0.0
    %980 = vmatprep.subr.mxu0 0.0
    %981 = vmatpush1.msra.mxu0 0.0
    %982 = vmatprep.subr.mxu0 0.0
    %983 = vmatpush1.msra.mxu0 0.0
    %984 = vmatprep.subr.mxu0 0.0
    %985 = vmatpush1.msra.mxu0 0.0
    %986 = vmatprep.subr.mxu0 0.0
    %987 = vmatpush1.msra.mxu0 0.0
    %988 = vmatprep.subr.mxu0 0.0
    %989 = vmatpush1.msra.mxu0 0.0
    %990 = vmatprep.subr.mxu0 0.0
    %991 = vmatpush1.msra.mxu0 0.0
    %992 = vmatprep.mubr.f32.mxu0 0.0
    %v993 = vand.u32 %v512, 4294901760
    %994 = vmatmul.mubr.f32.gmra.mrb[0].mxu0 %v993
    %v995 = vpop.f32.mrb[0].mxu0
    %v996 = vadd.f32 %v921, %v995
    %v997 = vpop.f32.mrb[0].mxu0
    %998 = vdwg.mxu0
    %v999 = vmul.f32 %v503, %v503
    %v1000 = vsub.f32 %v999, %v996
    %v1001 = vmul.f32 %v1000, 0.5
    %vm1002 = vcmask 130048
    %1003 = vst.msk [vmem:[#allocation2] sm:$0xff] %vm1002, %v1001
    // Predicated region
    $region10: #{fm_forward.1} parent=1 // pred_check
      _
    $region11: #{fm_forward.1} parent=1 // pred_check_branch
      %1005 = sbr.rel (0) target = $region13
    $region12: #{fm_forward.1} parent=1 // pred_region
      %s1007 = ssub.s32 128, 128
      %1008 = vsyncadd [#allocation3], %s1007
      %s1010 = sshll.u32 [#allocation2], 4
      %s1011 = int_to_ptr.vmem [resolvable:$true] %s1010
      %1013 = dma.vmem_to_hbm [thread:$0]  %s1011, 128, %s2, [#allocation3]
    $region13: #{fm_forward.1} parent=1 // pred_fallthru
      _
    // Predicated region
    $region14: #{fm_forward.1} parent=1 // pred_check
      _
    $region15: #{fm_forward.1} parent=1 // pred_check_branch
      %1015 = sbr.rel (0) target = $region17
    $region16: #{fm_forward.1} parent=1 // pred_region
      %1016 = dma.done [#allocation3], 128
    $region17: #{fm_forward.1} parent=1 // pred_fallthru
      _
    %1017 = vsyncpa [#allocation3], 1

</llo_original>
